<compile_context>
chip_gen: v6e
topology: v6e:2x2x1
jax: 0.10.0
libtpu: 0.0.40
codegen_flags: <defaults>
</compile_context>

<pallas_src>
import jax
import jax.numpy as jnp
import numpy as np
from jax.experimental import pallas as pl
from jax.experimental.pallas import tpu as pltpu

BN_EPS = 1e-5    # nn.BatchNorm1d default eps
L2_EPS = 1e-12   # F.normalize default eps


def nvld_kernel(x_ref, clusters_ref, shift_ref, c2_ref, w_ref, out_ref):
    x = x_ref[...]                         # (TB, N, D)  bf16
    clusters = clusters_ref[...]           # (D, K)      bf16 (BN scale folded in)
    shift = shift_ref[...]                 # (1, K)      f32  (BN shift folded in)
    c2 = c2_ref[...]                       # (K, D)      f32  == clusters2[0].T
    w = w_ref[...]                         # (K*D, 2)    f32  permuted fc weight

    TB, N, D = x.shape
    K = clusters.shape[1]

    # ---- NetVLAD soft assignment: (TB*N, D) @ (D, K) on the MXU, f32 accumulation ----
    assign = jnp.dot(x.reshape(TB * N, D), clusters,
                     preferred_element_type=jnp.float32)            # (TB*N, K)
    assign = assign + shift                                          # folded BatchNorm1d

    # softmax over clusters (EUP exp + approx reciprocal; both off the VALU slot)
    m = jnp.max(assign, axis=-1, keepdims=True)
    e = jnp.exp(assign - m)
    p = e * pl.reciprocal(jnp.sum(e, axis=-1, keepdims=True), approx=True)
    p3 = p.reshape(TB, N, K)                                         # (TB, N, K) f32

    # vlad = assignment^T @ x per batch row (batched MXU matmul, bf16 ops / f32 acc),
    # then subtract a = (sum_n assignment) * clusters2 (VPU broadcast multiply, f32).
    vlad = jax.lax.dot_general(
        p3.astype(jnp.bfloat16), x,
        dimension_numbers=(((1,), (1,)), ((0,), (0,))),
        preferred_element_type=jnp.float32)                          # (TB, K, D)
    a_sum = jnp.sum(p3, axis=1)                                      # (TB, K)
    vlad = vlad - a_sum[:, :, None] * c2[None, :, :]                 # (TB, K, D)

    # intra-cluster L2 norm (PyTorch normalizes (B, D, K) over dim=1 == D here)
    ss = jnp.sum(vlad * vlad, axis=2, keepdims=True)                 # (TB, K, 1)
    vlad = vlad * jax.lax.rsqrt(jnp.maximum(ss, L2_EPS * L2_EPS))

    # global L2 norm over the flattened D*K vector
    g = jnp.sum(jnp.sum(vlad * vlad, axis=2, keepdims=True), axis=1, keepdims=True)
    vlad = vlad * jax.lax.rsqrt(jnp.maximum(g, L2_EPS * L2_EPS))

    # dropout: identity (eval mode)

    # fc (no bias) as a single MXU matmul: (TB, K*D) @ (K*D, 2)
    logits = jnp.dot(vlad.reshape(TB, K * D), w,
                     preferred_element_type=jnp.float32)             # (TB, 2)

    # softmax over the 2 MoE logits (tiny; exact divide for bitwise-safe gate probs)
    lm = jnp.max(logits, axis=-1, keepdims=True)
    el = jnp.exp(logits - lm)
    out_ref[...] = el / jnp.sum(el, axis=-1, keepdims=True)          # (TB, 2)


def nvld_prepare_params(params):
    """One-time parameter preprocessing (BN fold, layout permutes, dtype casts).

    Call this once (outside the per-step forward) and reuse the result.
    """
    clusters = params['clusters']                                    # (D, K)
    D, K = clusters.shape
    # Fold BatchNorm1d (inference stats) into the cluster matrix + a shift.
    scale = params['bn_gamma'] * jax.lax.rsqrt(params['bn_var'] + BN_EPS)   # (K,)
    shift = params['bn_beta'] - params['bn_mean'] * scale                   # (K,)
    clusters_bn = (clusters * scale[None, :]).astype(jnp.bfloat16)          # (D, K) bf16
    c2_kd = jnp.transpose(params['clusters2'][0], (1, 0)).astype(jnp.float32)  # (K, D)
    # fc weight (2, D*K) flattened with K fastest: (2, D, K) -> (2, K, D) -> (K*D, 2)
    w = jnp.transpose(params['fc_w'].reshape(2, D, K), (0, 2, 1)).reshape(2, K * D)
    w = jnp.transpose(w, (1, 0)).astype(jnp.float32)                        # (K*D, 2)
    return {
        'clusters_bn': clusters_bn,
        'shift': shift.reshape(1, K).astype(jnp.float32),
        'c2': c2_kd,
        'w': w,
    }


def nvld_forward(query_feat, prep):
    """Pallas-backed NVLDModel.forward. Returns {'vid': (B,), 'sub': (B,)}."""
    B, N, D = query_feat.shape
    K = prep['clusters_bn'].shape[1]

    # Batch tile: whole batch if small, else 256-row tiles (multiple of 8 so the
    # (TB, 2) output block satisfies the sublane constraint; partial last tile OK).
    TB = B if B <= 256 else 256
    grid = (pl.cdiv(B, TB),)

    # bf16 at the call boundary halves HBM traffic for the dominant tensor.
    x = query_feat.astype(jnp.bfloat16)

    # Advisory cost estimate (two MXU matmuls dominate flops; x dominates bytes).
    cost = pl.CostEstimate(
        flops=4 * B * N * D * K + 4 * B * K * D,
        transcendentals=B * N * K + 2 * B,
        bytes_accessed=(x.size * 2 + prep['clusters_bn'].size * 2
                        + prep['c2'].size * 4 + prep['w'].size * 4 + B * 2 * 4),
    )

    out = pl.pallas_call(
        nvld_kernel,
        out_shape=jax.ShapeDtypeStruct((B, 2), jnp.float32),
        grid=grid,
        in_specs=[
            pl.BlockSpec((TB, N, D), lambda b: (b, 0, 0)),   # x: tiled over batch
            pl.BlockSpec((D, K),     lambda b: (0, 0)),      # weights: grid-resident
            pl.BlockSpec((1, K),     lambda b: (0, 0)),
            pl.BlockSpec((K, D),     lambda b: (0, 0)),
            pl.BlockSpec((K * D, 2), lambda b: (0, 0)),
        ],
        out_specs=pl.BlockSpec((TB, 2), lambda b: (b, 0)),
        compiler_params=pltpu.CompilerParams(
            dimension_semantics=("parallel",),               # megacore-split batch tiles
            vmem_limit_bytes=64 * 1024 * 1024),
        cost_estimate=cost,
    )(x, prep['clusters_bn'], prep['shift'], prep['c2'], prep['w'])

    return {'vid': out[:, 0], 'sub': out[:, 1]}


def nvld_reference(query_feat, params):
    """Pure-JAX f32 mirror of the PyTorch forward (eval mode), for verification."""
    B, N, D = query_feat.shape
    clusters, clusters2 = params['clusters'], params['clusters2']
    K = clusters.shape[1]
    x = query_feat.reshape(-1, D)
    assign = x @ clusters
    assign = ((assign - params['bn_mean']) / jnp.sqrt(params['bn_var'] + BN_EPS)
              * params['bn_gamma'] + params['bn_beta'])
    assign = jax.nn.softmax(assign, axis=1)
    assign = assign.reshape(B, N, K)
    a_sum = jnp.sum(assign, axis=1, keepdims=True)               # (B, 1, K)
    a = a_sum * clusters2                                        # (B, D, K)
    vlad = jnp.matmul(jnp.transpose(assign, (0, 2, 1)), query_feat)  # (B, K, D)
    vlad = jnp.transpose(vlad, (0, 2, 1)) - a                    # (B, D, K)
    vlad = vlad / jnp.maximum(jnp.linalg.norm(vlad, axis=1, keepdims=True), L2_EPS)
    vlad = vlad.reshape(B, D * K)
    vlad = vlad / jnp.maximum(jnp.linalg.norm(vlad, axis=1, keepdims=True), L2_EPS)
    logits = vlad @ params['fc_w'].T                             # (B, 2)
    probs = jax.nn.softmax(logits, axis=1)
    return {'vid': probs[:, 0], 'sub': probs[:, 1]}


if __name__ == "__main__":
    # config.hidden_size = 32, config.text_cluster = 8; batch=2, seq=8
    B, N, D, K = 2, 8, 32, 8
    key = jax.random.PRNGKey(0)
    kx, kc, kc2, kw = jax.random.split(key, 4)

    query_feat = jax.random.normal(kx, (B, N, D), dtype=jnp.float32)

    init_sc = 1.0 / np.sqrt(D)
    params = {
        'clusters':  init_sc * jax.random.normal(kc,  (D, K),    dtype=jnp.float32),
        'clusters2': init_sc * jax.random.normal(kc2, (1, D, K), dtype=jnp.float32),
        'bn_gamma':  jnp.ones((K,), jnp.float32),
        'bn_beta':   jnp.zeros((K,), jnp.float32),
        'bn_mean':   jnp.zeros((K,), jnp.float32),
        'bn_var':    jnp.ones((K,), jnp.float32),
        # nn.Linear(out_dim, 2, bias=False): uniform(-1/sqrt(in), 1/sqrt(in))
        'fc_w': (1.0 / np.sqrt(D * K)) * jax.random.uniform(
            kw, (2, D * K), dtype=jnp.float32, minval=-1.0, maxval=1.0),
    }

    prep = nvld_prepare_params(params)   # one-time param prep (hoisted out of forward)
    out = nvld_forward(query_feat, prep)
    jax.block_until_ready(out)

    ref = nvld_reference(query_feat, params)
    # Tolerance accounts for bf16 MXU operands (f32 accumulation) + approx reciprocal.
    for name in ('vid', 'sub'):
        np.testing.assert_allclose(np.asarray(out[name]), np.asarray(ref[name]),
                                   rtol=5e-3, atol=5e-3)

    print("KERNEL_OK")
</pallas_src>

<mosaic_0001>
module attributes {stable_mosaic.version = 11 : i64} {
  func.func @nvld_kernel(%arg0: i32, %arg1: memref<2x8x32xbf16, #tpu.memory_space<vmem>>, %arg2: memref<32x8xbf16, #tpu.memory_space<vmem>>, %arg3: memref<1x8xf32, #tpu.memory_space<vmem>>, %arg4: memref<8x32xf32, #tpu.memory_space<vmem>>, %arg5: memref<256x2xf32, #tpu.memory_space<vmem>>, %arg6: memref<2x2xf32, #tpu.memory_space<vmem>>) attributes {dimension_semantics = [#tpu.dimension_semantics<parallel>], iteration_bounds = array<i64: 1>, scalar_prefetch = 0 : i64, scratch_operands = 0 : i64, tpu.core_type = #tpu.core_type<tc>, window_params = [{transform_indices = @transform_0, window_bounds = array<i64: 2, 8, 32>}, {pipeline_mode = #tpu.pipeline_mode<synchronous>, transform_indices = @transform_1, window_bounds = array<i64: 32, 8>}, {pipeline_mode = #tpu.pipeline_mode<synchronous>, transform_indices = @transform_2, window_bounds = array<i64: 1, 8>}, {pipeline_mode = #tpu.pipeline_mode<synchronous>, transform_indices = @transform_3, window_bounds = array<i64: 8, 32>}, {pipeline_mode = #tpu.pipeline_mode<synchronous>, transform_indices = @transform_4, window_bounds = array<i64: 256, 2>}, {transform_indices = @transform_5, window_bounds = array<i64: 2, 2>}]} {
    %c0 = arith.constant 0 : index
    %c0_0 = arith.constant 0 : index
    %c0_1 = arith.constant 0 : index
    %0 = vector.load %arg1[%c0, %c0_0, %c0_1] : memref<2x8x32xbf16, #tpu.memory_space<vmem>>, vector<2x8x32xbf16>
    %c0_2 = arith.constant 0 : index
    %c0_3 = arith.constant 0 : index
    %1 = vector.load %arg2[%c0_2, %c0_3] : memref<32x8xbf16, #tpu.memory_space<vmem>>, vector<32x8xbf16>
    %c0_4 = arith.constant 0 : index
    %c0_5 = arith.constant 0 : index
    %2 = vector.load %arg3[%c0_4, %c0_5] : memref<1x8xf32, #tpu.memory_space<vmem>>, vector<1x8xf32>
    %c0_6 = arith.constant 0 : index
    %c0_7 = arith.constant 0 : index
    %3 = vector.load %arg4[%c0_6, %c0_7] : memref<8x32xf32, #tpu.memory_space<vmem>>, vector<8x32xf32>
    %c0_8 = arith.constant 0 : index
    %c0_9 = arith.constant 0 : index
    %4 = vector.load %arg5[%c0_8, %c0_9] : memref<256x2xf32, #tpu.memory_space<vmem>>, vector<256x2xf32>
    %5 = vector.shape_cast %0 : vector<2x8x32xbf16> to vector<16x32xbf16>
    %cst = arith.constant dense<0.000000e+00> : vector<16x8xf32>
    %6 = tpu.matmul %5, %1, %cst {dimension_numbers = #tpu.dot_dimension_numbers<[1], [0], [0], [1], [0, 0, 1, 1], [], []>} : vector<16x32xbf16>, vector<32x8xbf16>, vector<16x8xf32> -> vector<16x8xf32>
    %7 = vector.broadcast %2 : vector<1x8xf32> to vector<16x8xf32>
    %8 = arith.addf %6, %7 : vector<16x8xf32>
    %cst_10 = arith.constant dense<0xFF800000> : vector<16xf32>
    %9 = vector.multi_reduction <maximumf>, %8, %cst_10 [1] : vector<16x8xf32> to vector<16xf32>
    %10 = vector.shape_cast %9 : vector<16xf32> to vector<16x1xf32>
    %11 = vector.broadcast %10 : vector<16x1xf32> to vector<16x8xf32>
    %12 = arith.subf %8, %11 : vector<16x8xf32>
    %13 = math.exp %12 : vector<16x8xf32>
    %cst_11 = arith.constant dense<0.000000e+00> : vector<16xf32>
    %14 = vector.multi_reduction <add>, %13, %cst_11 [1] : vector<16x8xf32> to vector<16xf32>
    %15 = vector.shape_cast %14 : vector<16xf32> to vector<16x1xf32>
    %16 = tpu.reciprocal %15 {approx = true} : vector<16x1xf32> -> vector<16x1xf32>
    %17 = vector.broadcast %16 : vector<16x1xf32> to vector<16x8xf32>
    %18 = arith.mulf %13, %17 : vector<16x8xf32>
    %19 = vector.shape_cast %18 : vector<16x8xf32> to vector<2x8x8xf32>
    %20 = arith.truncf %19 : vector<2x8x8xf32> to vector<2x8x8xbf16>
    %cst_12 = arith.constant dense<0.000000e+00> : vector<2x8x32xf32>
    %21 = tpu.matmul %20, %0, %cst_12 {dimension_numbers = #tpu.dot_dimension_numbers<[1], [1], [2], [2], [0, 0, 0, 2, 1, 2], [0], [0]>} : vector<2x8x8xbf16>, vector<2x8x32xbf16>, vector<2x8x32xf32> -> vector<2x8x32xf32>
    %cst_13 = arith.constant dense<0.000000e+00> : vector<2x8xf32>
    %22 = vector.multi_reduction <add>, %19, %cst_13 [1] : vector<2x8x8xf32> to vector<2x8xf32>
    %23 = vector.shape_cast %22 : vector<2x8xf32> to vector<2x8x1xf32>
    %24 = vector.shape_cast %3 : vector<8x32xf32> to vector<1x8x32xf32>
    %25 = vector.broadcast %23 : vector<2x8x1xf32> to vector<2x8x32xf32>
    %26 = vector.broadcast %24 : vector<1x8x32xf32> to vector<2x8x32xf32>
    %27 = arith.mulf %25, %26 : vector<2x8x32xf32>
    %28 = arith.subf %21, %27 : vector<2x8x32xf32>
    %29 = arith.mulf %28, %28 : vector<2x8x32xf32>
    %cst_14 = arith.constant dense<0.000000e+00> : vector<2x8xf32>
    %30 = vector.multi_reduction <add>, %29, %cst_14 [2] : vector<2x8x32xf32> to vector<2x8xf32>
    %31 = vector.shape_cast %30 : vector<2x8xf32> to vector<2x8x1xf32>
    %cst_15 = arith.constant 1.000000e-24 : f32
    %32 = vector.broadcast %cst_15 : f32 to vector<2x8x1xf32>
    %33 = arith.maximumf %31, %32 : vector<2x8x1xf32>
    %34 = math.rsqrt %33 : vector<2x8x1xf32>
    %35 = vector.broadcast %34 : vector<2x8x1xf32> to vector<2x8x32xf32>
    %36 = arith.mulf %28, %35 : vector<2x8x32xf32>
    %37 = arith.mulf %36, %36 : vector<2x8x32xf32>
    %cst_16 = arith.constant dense<0.000000e+00> : vector<2x8xf32>
    %38 = vector.multi_reduction <add>, %37, %cst_16 [2] : vector<2x8x32xf32> to vector<2x8xf32>
    %39 = vector.shape_cast %38 : vector<2x8xf32> to vector<2x8x1xf32>
    %cst_17 = arith.constant dense<0.000000e+00> : vector<2x1xf32>
    %40 = vector.multi_reduction <add>, %39, %cst_17 [1] : vector<2x8x1xf32> to vector<2x1xf32>
    %41 = vector.shape_cast %40 : vector<2x1xf32> to vector<2x1x1xf32>
    %cst_18 = arith.constant 1.000000e-24 : f32
    %42 = vector.broadcast %cst_18 : f32 to vector<2x1x1xf32>
    %43 = arith.maximumf %41, %42 : vector<2x1x1xf32>
    %44 = math.rsqrt %43 : vector<2x1x1xf32>
    %45 = vector.broadcast %44 : vector<2x1x1xf32> to vector<2x8x32xf32>
    %46 = arith.mulf %36, %45 : vector<2x8x32xf32>
    %47 = vector.shape_cast %46 : vector<2x8x32xf32> to vector<2x256xf32>
    %cst_19 = arith.constant dense<0.000000e+00> : vector<2x2xf32>
    %48 = tpu.matmul %47, %4, %cst_19 {dimension_numbers = #tpu.dot_dimension_numbers<[1], [0], [0], [1], [0, 0, 1, 1], [], []>} : vector<2x256xf32>, vector<256x2xf32>, vector<2x2xf32> -> vector<2x2xf32>
    %cst_20 = arith.constant dense<0xFF800000> : vector<2xf32>
    %49 = vector.multi_reduction <maximumf>, %48, %cst_20 [1] : vector<2x2xf32> to vector<2xf32>
    %50 = vector.shape_cast %49 : vector<2xf32> to vector<2x1xf32>
    %51 = vector.broadcast %50 : vector<2x1xf32> to vector<2x2xf32>
    %52 = arith.subf %48, %51 : vector<2x2xf32>
    %53 = math.exp %52 : vector<2x2xf32>
    %cst_21 = arith.constant dense<0.000000e+00> : vector<2xf32>
    %54 = vector.multi_reduction <add>, %53, %cst_21 [1] : vector<2x2xf32> to vector<2xf32>
    %55 = vector.shape_cast %54 : vector<2xf32> to vector<2x1xf32>
    %56 = vector.broadcast %55 : vector<2x1xf32> to vector<2x2xf32>
    %57 = arith.divf %53, %56 : vector<2x2xf32>
    %c0_22 = arith.constant 0 : index
    %c0_23 = arith.constant 0 : index
    %58 = vector.load %arg6[%c0_22, %c0_23] : memref<2x2xf32, #tpu.memory_space<vmem>>, vector<2x2xf32>
    tpu.vector_store %arg6[%c0_22, %c0_23], %57 {strides = array<i32>} : memref<2x2xf32, #tpu.memory_space<vmem>>, vector<2x2xf32>,
    return
  }
  func.func @transform_0(%arg0: i32) -> (i32, i32, i32) {
    %c0_i32 = arith.constant 0 : i32
    %c0_i32_0 = arith.constant 0 : i32
    %c0_i32_1 = arith.constant 0 : i32
    return %arg0, %c0_i32, %c0_i32_0 : i32, i32, i32
  }
  func.func @transform_1(%arg0: i32) -> (i32, i32) {
    %c0_i32 = arith.constant 0 : i32
    %c0_i32_0 = arith.constant 0 : i32
    %c0_i32_1 = arith.constant 0 : i32
    return %c0_i32, %c0_i32_0 : i32, i32
  }
  func.func @transform_2(%arg0: i32) -> (i32, i32) {
    %c0_i32 = arith.constant 0 : i32
    %c0_i32_0 = arith.constant 0 : i32
    %c0_i32_1 = arith.constant 0 : i32
    return %c0_i32, %c0_i32_0 : i32, i32
  }
  func.func @transform_3(%arg0: i32) -> (i32, i32) {
    %c0_i32 = arith.constant 0 : i32
    %c0_i32_0 = arith.constant 0 : i32
    %c0_i32_1 = arith.constant 0 : i32
    return %c0_i32, %c0_i32_0 : i32, i32
  }
  func.func @transform_4(%arg0: i32) -> (i32, i32) {
    %c0_i32 = arith.constant 0 : i32
    %c0_i32_0 = arith.constant 0 : i32
    %c0_i32_1 = arith.constant 0 : i32
    return %c0_i32, %c0_i32_0 : i32, i32
  }
  func.func @transform_5(%arg0: i32) -> (i32, i32) {
    %c0_i32 = arith.constant 0 : i32
    %c0_i32_0 = arith.constant 0 : i32
    return %arg0, %c0_i32 : i32, i32
  }
}

</mosaic_0001>

<llo_original>
// kernel: tpu_custom_call.1
$region0: #{tpu_custom_call.1}
  #allocation0 [shape = 'u32[]', space=smem, size = 0x4, offset = 0x4, fixed_abs, tag = 'smem constant byte address 0x4 - core index']
  #allocation1 [shape = 'u32[144,128]{1,0:T(1,128)}', space=vmem, size = 0x12000, scoped, tag = 'internal scratch']
  %s0 = inlined_call_operand.vmem [shape: bf16[2,8,32], index: 0, kind: input, shape index: {}]
  %s1 = inlined_call_operand.vmem [shape: bf16[32,8], index: 1, kind: input, shape index: {}]
  %s2 = inlined_call_operand.vmem [shape: f32[1,8], index: 2, kind: input, shape index: {}]
  %s3 = inlined_call_operand.vmem [shape: f32[8,32], index: 3, kind: input, shape index: {}]
  %s4 = inlined_call_operand.vmem [shape: f32[256,2], index: 4, kind: input, shape index: {}]
  %s5 = inlined_call_operand.hbm [shape: f32[2,2], index: 5, kind: output, shape index: {}]
  %s6 = sld [smem:[#allocation0]]
  $region30: #{tpu_custom_call.1} parent=0
    _
  %s8 = ssub.s32 1, %s6
  %s9 = scalar_select 0, %s8, %s6
  $region1: #{tpu_custom_call.1} parent=0
    #allocation2 [shape = 'u8[1024]{0}', space=vmem, size = 0x400, scoped, tag = 'output window, operand 0, single buffered']
    #allocation3 [shape = 's32[1]{0}', space=sflag, size = 0x4, scoped, tag = 'scoped memory for tpu_custom_call.1']
    %10 = vsyncpa [#allocation3], 0
    // Predicated region
    $region2: #{tpu_custom_call.1} parent=1 // pred_check
      _
    $region3: #{tpu_custom_call.1} parent=1 // pred_check_branch
      %12 = sbr.rel (0) target = $region5
    $region4: #{tpu_custom_call.1} parent=1 // pred_region
      _
    $region5: #{tpu_custom_call.1} parent=1 // pred_fallthru
      _
    // Predicated region
    $region6: #{tpu_custom_call.1} parent=1 // pred_check
      _
    $region7: #{tpu_custom_call.1} parent=1 // pred_check_branch
      %14 = sbr.rel (0) target = $region9
    $region8: #{tpu_custom_call.1} parent=1 // pred_region
      _
    $region9: #{tpu_custom_call.1} parent=1 // pred_fallthru
      _
    // Predicated region
    $region10: #{tpu_custom_call.1} parent=1 // pred_check
      _
    $region11: #{tpu_custom_call.1} parent=1 // pred_check_branch
      %16 = sbr.rel (0) target = $region13
    $region12: #{tpu_custom_call.1} parent=1 // pred_region
      _
    $region13: #{tpu_custom_call.1} parent=1 // pred_fallthru
      _
    // Predicated region
    $region14: #{tpu_custom_call.1} parent=1 // pred_check
      _
    $region15: #{tpu_custom_call.1} parent=1 // pred_check_branch
      %18 = sbr.rel (0) target = $region17
    $region16: #{tpu_custom_call.1} parent=1 // pred_region
      _
    $region17: #{tpu_custom_call.1} parent=1 // pred_fallthru
      _
    // Predicated region
    $region18: #{tpu_custom_call.1} parent=1 // pred_check
      _
    $region19: #{tpu_custom_call.1} parent=1 // pred_check_branch
      %20 = sbr.rel (0) target = $region21
    $region20: #{tpu_custom_call.1} parent=1 // pred_region
      _
    $region21: #{tpu_custom_call.1} parent=1 // pred_fallthru
      _
    %v22 = vld [vmem:[%s0] sm:$0xf]
    %v23 = vld [vmem:[%s0 + $0x4] sm:$0xf]
    %v24 = vld [vmem:[%s1] sm:$0xf]
    %v25 = vld [vmem:[%s1 + $0x4] sm:$0xf]
    %v26 = vld [vmem:[%s1 + $0x8] sm:$0xf]
    %v27 = vld [vmem:[%s1 + $0xc] sm:$0xf]
    %v28 = vld [vmem:[%s2] sm:$0x1]
    %v29 = vld [vmem:[%s3] sm:$0xff]
    %v30 = vld [vmem:[%s4] sm:$0xff]
    %v31 = vld [vmem:[%s4 + $0x8] sm:$0xff]
    %v32 = vld [vmem:[%s4 + $0x10] sm:$0xff]
    %v33 = vld [vmem:[%s4 + $0x18] sm:$0xff]
    %v34 = vld [vmem:[%s4 + $0x20] sm:$0xff]
    %v35 = vld [vmem:[%s4 + $0x28] sm:$0xff]
    %v36 = vld [vmem:[%s4 + $0x30] sm:$0xff]
    %v37 = vld [vmem:[%s4 + $0x38] sm:$0xff]
    %v38 = vld [vmem:[%s4 + $0x40] sm:$0xff]
    %v39 = vld [vmem:[%s4 + $0x48] sm:$0xff]
    %v40 = vld [vmem:[%s4 + $0x50] sm:$0xff]
    %v41 = vld [vmem:[%s4 + $0x58] sm:$0xff]
    %v42 = vld [vmem:[%s4 + $0x60] sm:$0xff]
    %v43 = vld [vmem:[%s4 + $0x68] sm:$0xff]
    %v44 = vld [vmem:[%s4 + $0x70] sm:$0xff]
    %v45 = vld [vmem:[%s4 + $0x78] sm:$0xff]
    %v46 = vld [vmem:[%s4 + $0x80] sm:$0xff]
    %v47 = vld [vmem:[%s4 + $0x88] sm:$0xff]
    %v48 = vld [vmem:[%s4 + $0x90] sm:$0xff]
    %v49 = vld [vmem:[%s4 + $0x98] sm:$0xff]
    %v50 = vld [vmem:[%s4 + $0xa0] sm:$0xff]
    %v51 = vld [vmem:[%s4 + $0xa8] sm:$0xff]
    %v52 = vld [vmem:[%s4 + $0xb0] sm:$0xff]
    %v53 = vld [vmem:[%s4 + $0xb8] sm:$0xff]
    %v54 = vld [vmem:[%s4 + $0xc0] sm:$0xff]
    %v55 = vld [vmem:[%s4 + $0xc8] sm:$0xff]
    %v56 = vld [vmem:[%s4 + $0xd0] sm:$0xff]
    %v57 = vld [vmem:[%s4 + $0xd8] sm:$0xff]
    %v58 = vld [vmem:[%s4 + $0xe0] sm:$0xff]
    %v59 = vld [vmem:[%s4 + $0xe8] sm:$0xff]
    %v60 = vld [vmem:[%s4 + $0xf0] sm:$0xff]
    %v61 = vld [vmem:[%s4 + $0xf8] sm:$0xff]
    %v63 = vlaneseq
    %v64 = vshrl.u32 %v63, 7
    %v65 = vsub.s32 0, %v64
    %v66 = vrot.slane %v28, %v65
    %v70 = vunpack.c.l.b16 %v22
    %v71 = vunpack.c.l.b16 %v23
    %v72 = vpack.c.b16 %v71, %v70
    %v77 = vunpack.c.l.b16 %v24
    %v78 = vunpack.c.l.b16 %v25
    %v79 = vunpack.c.l.b16 %v26
    %v80 = vunpack.c.l.b16 %v27
    %v81 = vpack.c.b16 %v78, %v77
    %v82 = vpack.c.b16 %v80, %v79
    %vm85 = vcmask 261120
    %v87 = vsel %vm85, %v72, 0
    %89 = vmatprep.subr.bf16.mxu0 0
    %90 = vmatpush1.bf16.msra.mxu0 0
    %91 = vmatprep.subr.bf16.mxu0 0
    %92 = vmatpush1.bf16.msra.mxu0 0
    %93 = vmatprep.subr.bf16.mxu0 0
    %94 = vmatpush1.bf16.msra.mxu0 0
    %95 = vmatprep.subr.bf16.mxu0 0
    %96 = vmatpush1.bf16.msra.mxu0 0
    %97 = vmatprep.subr.bf16.mxu0 0
    %98 = vmatpush1.bf16.msra.mxu0 0
    %99 = vmatprep.subr.bf16.mxu0 0
    %100 = vmatpush1.bf16.msra.mxu0 0
    %101 = vmatprep.subr.bf16.mxu0 0
    %102 = vmatpush1.bf16.msra.mxu0 %v82
    %103 = vmatprep.subr.bf16.mxu0 0
    %104 = vmatpush1.bf16.msra.mxu0 %v81
    %105 = vmatprep.subr.bf16.mxu0 0
    %106 = vmatpush2.bf16.msra.mxu0 0
    %107 = vmatprep.subr.bf16.mxu0 0
    %108 = vmatpush2.bf16.msra.mxu0 0
    %109 = vmatprep.subr.bf16.mxu0 0
    %110 = vmatpush2.bf16.msra.mxu0 0
    %111 = vmatprep.subr.bf16.mxu0 0
    %112 = vmatpush2.bf16.msra.mxu0 0
    %113 = vmatprep.subr.bf16.mxu0 0
    %114 = vmatpush2.bf16.msra.mxu0 0
    %115 = vmatprep.subr.bf16.mxu0 0
    %116 = vmatpush2.bf16.msra.mxu0 0
    %117 = vmatprep.subr.bf16.mxu0 0
    %118 = vmatpush2.bf16.msra.mxu0 0
    %119 = vmatprep.subr.bf16.mxu0 0
    %120 = vmatpush2.bf16.msra.mxu0 0
    %121 = vmatprep.mubr.bf16.mxu0 0
    %122 = vmatmul.mubr.bf16.gmra.mxu0 %v87
    %v123 = vpop.f32.mrf.mxu0
    %v124 = vadd.f32 %v66, %v123
    %v125 = vpop.f32.mrf.mxu0
    %v126 = vpop.f32.mrf.mxu0
    %v127 = vadd.f32 %v66, %v126
    %v128 = vpop.f32.mrf.mxu0
    %129 = vdwg.mxu0
    %vm130 = vcmask 64512
    %v131 = vsel %vm130, %v124, -inf
    %132 = vmax.xlane.f32.xlu0 %v131
    %v133 = vpop.xlane.xlu0 %132
    %v134 = vsel %vm130, %v127, -inf
    %135 = vmax.xlane.f32.xlu0 %v134
    %v136 = vpop.xlane.xlu0 %135
    %v137 = vsub.f32 %v124, %v133
    %v138 = vsub.f32 %v127, %v136
    %v139 = vmul.f32 %v137, 1.442695
    %v140 = vpow.pop %v139
    %v141 = vmul.f32 %v138, 1.442695
    %v142 = vpow.pop %v141
    %v143 = vsel %vm130, %v140, 0.0
    %144 = vadd.xlane.f32.xlu0 %v143
    %v145 = vpop.xlane.xlu0 %144
    %v146 = vsel %vm130, %v142, 0.0
    %147 = vadd.xlane.f32.xlu0 %v146
    %v148 = vpop.xlane.xlu0 %147
    %v149 = vrcp.pop %v145
    %v150 = vrcp.pop %v148
    %v151 = vmul.f32 %v140, %v149
    %v152 = vmul.f32 %v142, %v150
    %v153 = vpack.c.bf16 %v151, %v151
    %v154 = vpack.c.bf16 %v152, %v152
    %155 = vxpose.xlu0.c.b16.start [1/8] %v153, 128
    %156 = vxpose.xlu0.c.b16.cont [2/8] 0, 128
    %157 = vxpose.xlu0.c.b16.cont [3/8] 0, 128
    %158 = vxpose.xlu0.c.b16.cont [4/8] 0, 128
    %159 = vxpose.xlu0.c.b16.cont [5/8] 0, 128
    %160 = vxpose.xlu0.c.b16.cont [6/8] 0, 128
    %161 = vxpose.xlu0.c.b16.cont [7/8] 0, 128
    %162 = vxpose.xlu0.c.b16.end [8/8] 0, 128
    %v163 = vpop.trf.xlu0
    %v164 = vpop.trf.xlu0
    %v165 = vpop.trf.xlu0
    %v166 = vpop.trf.xlu0
    %v167 = vpop.trf.xlu0
    %v168 = vpop.trf.xlu0
    %v169 = vpop.trf.xlu0
    %v170 = vpop.trf.xlu0
    %v172 = vsel %vm130, %v163, 0
    %vm174 = vcmask 1043456
    %v176 = vsel %vm174, %v22, 0
    %178 = vmatprep.subr.bf16.mxu0 0
    %179 = vmatpush1.bf16.msra.mxu0 0
    %180 = vmatprep.subr.bf16.mxu0 0
    %181 = vmatpush1.bf16.msra.mxu0 0
    %182 = vmatprep.subr.bf16.mxu0 0
    %183 = vmatpush1.bf16.msra.mxu0 0
    %184 = vmatprep.subr.bf16.mxu0 0
    %185 = vmatpush1.bf16.msra.mxu0 0
    %186 = vmatprep.subr.bf16.mxu0 0
    %187 = vmatpush1.bf16.msra.mxu0 0
    %188 = vmatprep.subr.bf16.mxu0 0
    %189 = vmatpush1.bf16.msra.mxu0 0
    %190 = vmatprep.subr.bf16.mxu0 0
    %191 = vmatpush1.bf16.msra.mxu0 0
    %192 = vmatprep.subr.bf16.mxu0 0
    %193 = vmatpush1.bf16.msra.mxu0 %v176
    %194 = vmatprep.subr.bf16.mxu0 0
    %195 = vmatpush2.bf16.msra.mxu0 0
    %196 = vmatprep.subr.bf16.mxu0 0
    %197 = vmatpush2.bf16.msra.mxu0 0
    %198 = vmatprep.subr.bf16.mxu0 0
    %199 = vmatpush2.bf16.msra.mxu0 0
    %200 = vmatprep.subr.bf16.mxu0 0
    %201 = vmatpush2.bf16.msra.mxu0 0
    %202 = vmatprep.subr.bf16.mxu0 0
    %203 = vmatpush2.bf16.msra.mxu0 0
    %204 = vmatprep.subr.bf16.mxu0 0
    %205 = vmatpush2.bf16.msra.mxu0 0
    %206 = vmatprep.subr.bf16.mxu0 0
    %207 = vmatpush2.bf16.msra.mxu0 0
    %208 = vmatprep.subr.bf16.mxu0 0
    %209 = vmatpush2.bf16.msra.mxu0 0
    %210 = vmatprep.mubr.bf16.mxu0 0
    %211 = vmatmul.mubr.bf16.gmra.mxu0 %v172
    %v212 = vpop.f32.mrf.mxu0
    %v213 = vadd.f32 0.0, %v212
    %v214 = vpop.f32.mrf.mxu0
    %v215 = vpop.f32.mrf.mxu0
    %v216 = vpop.f32.mrf.mxu0
    %217 = vdwg.mxu0
    %218 = vxpose.xlu0.c.b16.start [1/8] %v154, 128
    %219 = vxpose.xlu0.c.b16.cont [2/8] 0, 128
    %220 = vxpose.xlu0.c.b16.cont [3/8] 0, 128
    %221 = vxpose.xlu0.c.b16.cont [4/8] 0, 128
    %222 = vxpose.xlu0.c.b16.cont [5/8] 0, 128
    %223 = vxpose.xlu0.c.b16.cont [6/8] 0, 128
    %224 = vxpose.xlu0.c.b16.cont [7/8] 0, 128
    %225 = vxpose.xlu0.c.b16.end [8/8] 0, 128
    %v226 = vpop.trf.xlu0
    %v227 = vpop.trf.xlu0
    %v228 = vpop.trf.xlu0
    %v229 = vpop.trf.xlu0
    %v230 = vpop.trf.xlu0
    %v231 = vpop.trf.xlu0
    %v232 = vpop.trf.xlu0
    %v233 = vpop.trf.xlu0
    %v235 = vsel %vm130, %v226, 0
    %v238 = vsel %vm174, %v23, 0
    %240 = vmatprep.subr.bf16.mxu0 0
    %241 = vmatpush1.bf16.msra.mxu0 0
    %242 = vmatprep.subr.bf16.mxu0 0
    %243 = vmatpush1.bf16.msra.mxu0 0
    %244 = vmatprep.subr.bf16.mxu0 0
    %245 = vmatpush1.bf16.msra.mxu0 0
    %246 = vmatprep.subr.bf16.mxu0 0
    %247 = vmatpush1.bf16.msra.mxu0 0
    %248 = vmatprep.subr.bf16.mxu0 0
    %249 = vmatpush1.bf16.msra.mxu0 0
    %250 = vmatprep.subr.bf16.mxu0 0
    %251 = vmatpush1.bf16.msra.mxu0 0
    %252 = vmatprep.subr.bf16.mxu0 0
    %253 = vmatpush1.bf16.msra.mxu0 0
    %254 = vmatprep.subr.bf16.mxu0 0
    %255 = vmatpush1.bf16.msra.mxu0 %v238
    %256 = vmatprep.subr.bf16.mxu0 0
    %257 = vmatpush2.bf16.msra.mxu0 0
    %258 = vmatprep.subr.bf16.mxu0 0
    %259 = vmatpush2.bf16.msra.mxu0 0
    %260 = vmatprep.subr.bf16.mxu0 0
    %261 = vmatpush2.bf16.msra.mxu0 0
    %262 = vmatprep.subr.bf16.mxu0 0
    %263 = vmatpush2.bf16.msra.mxu0 0
    %264 = vmatprep.subr.bf16.mxu0 0
    %265 = vmatpush2.bf16.msra.mxu0 0
    %266 = vmatprep.subr.bf16.mxu0 0
    %267 = vmatpush2.bf16.msra.mxu0 0
    %268 = vmatprep.subr.bf16.mxu0 0
    %269 = vmatpush2.bf16.msra.mxu0 0
    %270 = vmatprep.subr.bf16.mxu0 0
    %271 = vmatpush2.bf16.msra.mxu0 0
    %272 = vmatprep.mubr.bf16.mxu0 0
    %273 = vmatmul.mubr.bf16.gmra.mxu0 %v235
    %v274 = vpop.f32.mrf.mxu0
    %v275 = vadd.f32 0.0, %v274
    %v276 = vpop.f32.mrf.mxu0
    %v277 = vpop.f32.mrf.mxu0
    %v278 = vpop.f32.mrf.mxu0
    %279 = vdwg.mxu0
    %v280 = vsel %vm130, %v151, 0.0
    %v281 = vrot.slane %v280, 4
    %v282 = vadd.f32 %v280, %v281
    %v283 = vrot.slane %v282, 2
    %v284 = vadd.f32 %v282, %v283
    %v285 = vrot.slane %v284, 1
    %v286 = vadd.f32 %v284, %v285
    %v287 = vsel %vm130, %v152, 0.0
    %v288 = vrot.slane %v287, 4
    %v289 = vadd.f32 %v287, %v288
    %v290 = vrot.slane %v289, 2
    %v291 = vadd.f32 %v289, %v290
    %v292 = vrot.slane %v291, 1
    %v293 = vadd.f32 %v291, %v292
    %295 = vbcast.lane.b32.xlu0 %v286, 256
    %v296 = vpop.permute.xlu0 %295
    %298 = vbcast.lane.b32.xlu0 %v293, 256
    %v299 = vpop.permute.xlu0 %298
    %v300 = vmul.f32 %v296, %v29
    %v301 = vmul.f32 %v299, %v29
    %v302 = vsub.f32 %v213, %v300
    %v303 = vsub.f32 %v275, %v301
    %v304 = vmul.f32 %v302, %v302
    %v305 = vmul.f32 %v303, %v303
    %v306 = vsel %vm85, %v304, 0.0
    %307 = vadd.xlane.f32.xlu0 %v306
    %v308 = vpop.xlane.xlu0 %307
    %v309 = vsel %vm85, %v305, 0.0
    %310 = vadd.xlane.f32.xlu0 %v309
    %v311 = vpop.xlane.xlu0 %310
    %v312 = vmax.f32 %v308, 1e-24
    %v313 = vmax.f32 %v311, 1e-24
    %v314 = vrsqrt.pop %v312
    %v315 = vrsqrt.pop %v313
    %v316 = vmul.f32 %v302, %v314
    %v317 = vmul.f32 %v303, %v315
    %v318 = vmul.f32 %v316, %v316
    %v319 = vmul.f32 %v317, %v317
    %v320 = vsel %vm85, %v318, 0.0
    %321 = vadd.xlane.f32.xlu0 %v320
    %v322 = vpop.xlane.xlu0 %321
    %v323 = vsel %vm85, %v319, 0.0
    %324 = vadd.xlane.f32.xlu0 %v323
    %v325 = vpop.xlane.xlu0 %324
    %v326 = vrot.slane %v322, 4
    %v327 = vadd.f32 %v322, %v326
    %v328 = vrot.slane %v327, 2
    %v329 = vadd.f32 %v327, %v328
    %v330 = vrot.slane %v329, 1
    %v331 = vadd.f32 %v329, %v330
    %v332 = vrot.slane %v325, 4
    %v333 = vadd.f32 %v325, %v332
    %v334 = vrot.slane %v333, 2
    %v335 = vadd.f32 %v333, %v334
    %v336 = vrot.slane %v335, 1
    %v337 = vadd.f32 %v335, %v336
    %v338 = vmax.f32 %v331, 1e-24
    %v339 = vmax.f32 %v337, 1e-24
    %v340 = vrsqrt.pop %v338
    %v341 = vrsqrt.pop %v339
    %v342 = vmul.f32 %v316, %v340
    %v343 = vmul.f32 %v317, %v341
    %v344 = vcombine.high %v342, 0.0
    %v346 = vunpack.c.l.s4 1983009808
    %v347 = vunpack.c.0.s8 %v346
    %v348 = vlaneseq
    %v349 = vshrl.u32 %v348, 7
    %v350 = vsub.s32 %v347, %v349
    %v351 = vrot.slane %v342, %v350
    %v353 = vunpack.c.l.s4 1983009808
    %v354 = vunpack.c.0.s8 %v353
    %v355 = vlaneseq
    %v356 = vshrl.u32 %v355, 7
    %v357 = vsub.s32 %v354, %v356
    %v358 = vrot.slane %v344, %v357
    %v359 = vcombine.high %v343, 0.0
    %v361 = vunpack.c.l.s4 1983009808
    %v362 = vunpack.c.0.s8 %v361
    %v363 = vlaneseq
    %v364 = vshrl.u32 %v363, 7
    %v365 = vsub.s32 %v362, %v364
    %v366 = vrot.slane %v343, %v365
    %v368 = vunpack.c.l.s4 1983009808
    %v369 = vunpack.c.0.s8 %v368
    %v370 = vlaneseq
    %v371 = vshrl.u32 %v370, 7
    %v372 = vsub.s32 %v369, %v371
    %v373 = vrot.slane %v359, %v372
    %v374 = vcombine.low %v351, %v366
    %v375 = vcombine.high %v351, %v366
    %v377 = vunpack.c.l.s4 1934713408
    %v378 = vunpack.c.0.s8 %v377
    %v379 = vlaneseq
    %v380 = vshrl.u32 %v379, 7
    %v381 = vsub.s32 %v378, %v380
    %v382 = vrot.slane %v374, %v381
    %v384 = vunpack.c.l.s4 1934713408
    %v385 = vunpack.c.0.s8 %v384
    %v386 = vlaneseq
    %v387 = vshrl.u32 %v386, 7
    %v388 = vsub.s32 %v385, %v387
    %v389 = vrot.slane %v375, %v388
    %v390 = vcombine.low %v358, %v373
    %v391 = vcombine.high %v358, %v373
    %v393 = vunpack.c.l.s4 1934713408
    %v394 = vunpack.c.0.s8 %v393
    %v395 = vlaneseq
    %v396 = vshrl.u32 %v395, 7
    %v397 = vsub.s32 %v394, %v396
    %v398 = vrot.slane %v390, %v397
    %v400 = vunpack.c.l.s4 1934713408
    %v401 = vunpack.c.0.s8 %v400
    %v402 = vlaneseq
    %v403 = vshrl.u32 %v402, 7
    %v404 = vsub.s32 %v401, %v403
    %v405 = vrot.slane %v391, %v404
    %v406 = vcombine.high %v382, 0.0
    %v407 = vcombine.high %v389, 0.0
    %v408 = vcombine.high %v398, 0.0
    %v409 = vcombine.high %v405, 0.0
    %411 = vrot.lane.b32.xlu0 %v406, 32
    %v412 = vpop.permute.xlu0 %411
    %415 = vrot.lane.b32.xlu0 %v389, 64
    %v416 = vpop.permute.xlu0 %415
    %419 = vrot.lane.b32.xlu0 %v407, 96
    %v420 = vpop.permute.xlu0 %419
    %423 = vrot.lane.b32.xlu0 %v408, 32
    %v424 = vpop.permute.xlu0 %423
    %427 = vrot.lane.b32.xlu0 %v405, 64
    %v428 = vpop.permute.xlu0 %427
    %431 = vrot.lane.b32.xlu0 %v409, 96
    %v432 = vpop.permute.xlu0 %431
    %v434 = vsel %vm85, %v382, %v412
    %vm435 = vcmask 523264
    %v436 = vsel %vm435, %v434, %v416
    %vm437 = vcmask 785408
    %v438 = vsel %vm437, %v436, %v420
    %v439 = vsel %vm85, %v398, %v424
    %v440 = vsel %vm435, %v439, %v428
    %v441 = vsel %vm437, %v440, %v432
    %442 = vmatprep.subr.mxu0 0.0
    %443 = vmatpush1.msra.mxu0 %v45
    %444 = vmatprep.subr.mxu0 0.0
    %445 = vmatpush1.msra.mxu0 %v44
    %446 = vmatprep.subr.mxu0 0.0
    %447 = vmatpush1.msra.mxu0 %v43
    %448 = vmatprep.subr.mxu0 0.0
    %449 = vmatpush1.msra.mxu0 %v42
    %450 = vmatprep.subr.mxu0 0.0
    %451 = vmatpush1.msra.mxu0 %v41
    %452 = vmatprep.subr.mxu0 0.0
    %453 = vmatpush1.msra.mxu0 %v40
    %454 = vmatprep.subr.mxu0 0.0
    %455 = vmatpush1.msra.mxu0 %v39
    %456 = vmatprep.subr.mxu0 0.0
    %457 = vmatpush1.msra.mxu0 %v38
    %458 = vmatprep.subr.mxu0 0.0
    %459 = vmatpush1.msra.mxu0 %v37
    %460 = vmatprep.subr.mxu0 0.0
    %461 = vmatpush1.msra.mxu0 %v36
    %462 = vmatprep.subr.mxu0 0.0
    %463 = vmatpush1.msra.mxu0 %v35
    %464 = vmatprep.subr.mxu0 0.0
    %465 = vmatpush1.msra.mxu0 %v34
    %466 = vmatprep.subr.mxu0 0.0
    %467 = vmatpush1.msra.mxu0 %v33
    %468 = vmatprep.subr.mxu0 0.0
    %469 = vmatpush1.msra.mxu0 %v32
    %470 = vmatprep.subr.mxu0 0.0
    %471 = vmatpush1.msra.mxu0 %v31
    %472 = vmatprep.subr.mxu0 0.0
    %473 = vmatpush1.msra.mxu0 %v30
    %474 = vmatprep.subr.mxu0 0.0
    %475 = vmatpush2.msra.mxu0 %v61
    %476 = vmatprep.subr.mxu0 0.0
    %477 = vmatpush2.msra.mxu0 %v60
    %478 = vmatprep.subr.mxu0 0.0
    %479 = vmatpush2.msra.mxu0 %v59
    %480 = vmatprep.subr.mxu0 0.0
    %481 = vmatpush2.msra.mxu0 %v58
    %482 = vmatprep.subr.mxu0 0.0
    %483 = vmatpush2.msra.mxu0 %v57
    %484 = vmatprep.subr.mxu0 0.0
    %485 = vmatpush2.msra.mxu0 %v56
    %486 = vmatprep.subr.mxu0 0.0
    %487 = vmatpush2.msra.mxu0 %v55
    %488 = vmatprep.subr.mxu0 0.0
    %489 = vmatpush2.msra.mxu0 %v54
    %490 = vmatprep.subr.mxu0 0.0
    %491 = vmatpush2.msra.mxu0 %v53
    %492 = vmatprep.subr.mxu0 0.0
    %493 = vmatpush2.msra.mxu0 %v52
    %494 = vmatprep.subr.mxu0 0.0
    %495 = vmatpush2.msra.mxu0 %v51
    %496 = vmatprep.subr.mxu0 0.0
    %497 = vmatpush2.msra.mxu0 %v50
    %498 = vmatprep.subr.mxu0 0.0
    %499 = vmatpush2.msra.mxu0 %v49
    %500 = vmatprep.subr.mxu0 0.0
    %501 = vmatpush2.msra.mxu0 %v48
    %502 = vmatprep.subr.mxu0 0.0
    %503 = vmatpush2.msra.mxu0 %v47
    %504 = vmatprep.subr.mxu0 0.0
    %505 = vmatpush2.msra.mxu0 %v46
    %506 = vmatprep.mubr.f32.mxu0 %v441
    %507 = vmatmul.mubr.f32.gmra.mxu0 %v438
    %v508 = vpop.f32.mrf.mxu0
    %v509 = vadd.f32 0.0, %v508
    %v510 = vpop.f32.mrf.mxu0
    %511 = vdwg.mxu0
    %vm512 = vcmask 9216
    %v513 = vsel %vm512, %v509, -inf
    %514 = vmax.xlane.f32.xlu0 %v513
    %v515 = vpop.xlane.xlu0 %514
    %v516 = vsub.f32 %v509, %v515
    %v517 = vmul.f32 %v516, 1.442695
    %v518 = vpow.pop %v517
    %v519 = vsel %vm512, %v518, 0.0
    %520 = vadd.xlane.f32.xlu0 %v519
    %v521 = vpop.xlane.xlu0 %520
    %v522 = vrcp.pop %v521
    %v523 = vmul.f32 %v518, %v522
    %524 = vst.msk [vmem:[#allocation2] sm:$0x3] %vm512, %v523
    // Predicated region
    $region22: #{tpu_custom_call.1} parent=1 // pred_check
      _
    $region23: #{tpu_custom_call.1} parent=1 // pred_check_branch
      %526 = sbr.rel (0) target = $region25
    $region24: #{tpu_custom_call.1} parent=1 // pred_region
      %s528 = ssub.s32 32, 32
      %529 = vsyncadd [#allocation3], %s528
      %s531 = sshll.u32 [#allocation2], 4
      %s532 = int_to_ptr.vmem [resolvable:$true] %s531
      %534 = dma.vmem_to_hbm [thread:$0]  %s532, 32, %s5, [#allocation3]
    $region25: #{tpu_custom_call.1} parent=1 // pred_fallthru
      _
    // Predicated region
    $region26: #{tpu_custom_call.1} parent=1 // pred_check
      _
    $region27: #{tpu_custom_call.1} parent=1 // pred_check_branch
      %536 = sbr.rel (0) target = $region29
    $region28: #{tpu_custom_call.1} parent=1 // pred_region
      %537 = dma.done [#allocation3], 32
    $region29: #{tpu_custom_call.1} parent=1 // pred_fallthru
      _
    %538 = vsyncpa [#allocation3], 1

</llo_original>
